<compile_context>
chip_gen: v7x
topology: tpu7x:2x2x1
jax: 0.10.0
libtpu: 0.0.40
codegen_flags: <defaults>
</compile_context>

<pallas_src>
import jax
import jax.numpy as jnp
from jax.experimental import pallas as pl
from jax.experimental.pallas import tpu as pltpu


def _round_up(x, m):
    return (x + m - 1) // m * m


def patch_embed_kernel(x_ref, w_ref, b_ref, o_ref):
    # x_ref: (tm, K)  patch rows (bf16/f32)
    # w_ref: (K, E)   projection weight (bf16/f32)
    # b_ref: (1, E)   projection bias (f32)
    # o_ref: (tm, E)
    acc = jnp.dot(x_ref[...], w_ref[...], preferred_element_type=jnp.float32)
    o_ref[...] = (acc + b_ref[...]).astype(o_ref.dtype)


def patch_embed(x, weight, bias, patch_size, *, tm=1024,
                compute_dtype=jnp.bfloat16, out_dtype=None):
    """
    x:      [B, C, H, W]          (NCHW, PyTorch convention)
    weight: [E, C, ph, pw]        (PyTorch Conv2d weight layout, OIHW)
    bias:   [E]
    returns [B, num_patches, E]
    """
    B, C, H, W = x.shape
    E = weight.shape[0]
    ph = pw = patch_size
    gh, gw = H // ph, W // pw
    N = gh * gw
    K = C * ph * pw
    M = B * N
    # Default output dtype = compute dtype (bf16): halves store traffic vs f32
    # on the HBM-bound path; pass out_dtype=jnp.float32 if the consumer needs it.
    out_dtype = compute_dtype if out_dtype is None else out_dtype

    # --- glue: cast FIRST (so any materialized im2col copy is half-width),
    #           then extract patches ordered (C, ph, pw) to match conv weight.
    x = x.astype(compute_dtype)
    patches = x.reshape(B, C, gh, ph, gw, pw)
    patches = patches.transpose(0, 2, 4, 1, 3, 5).reshape(M, K)
    w_mat = weight.astype(compute_dtype).reshape(E, K).T   # [K, E]
    b_mat = bias.astype(jnp.float32).reshape(1, E)         # bias stays f32

    # --- tiling: lane-dense K/E, sublane-aligned rows, >=2 grid steps -------
    sub = 16 if jnp.dtype(compute_dtype).itemsize < 4 else 8
    # >=2 steps keeps both v7x TensorCores busy and preserves double-buffer
    # overlap on v5e/v6e; picking tm_eff = ceil(M / steps) minimizes padding.
    num_steps = max(2, pl.cdiv(M, tm))
    tm_eff = max(sub, _round_up(pl.cdiv(M, num_steps), sub))
    M_pad = tm_eff * num_steps
    K_pad = _round_up(K, 128)
    E_pad = _round_up(E, 128)

    if M_pad != M or K_pad != K:
        patches = jnp.pad(patches, ((0, M_pad - M), (0, K_pad - K)))
    if K_pad != K or E_pad != E:
        w_mat = jnp.pad(w_mat, ((0, K_pad - K), (0, E_pad - E)))
    if E_pad != E:
        b_mat = jnp.pad(b_mat, ((0, 0), (0, E_pad - E)))

    in_itemsize = jnp.dtype(compute_dtype).itemsize
    out_itemsize = jnp.dtype(out_dtype).itemsize
    # Same activation bytes whether or not the im2col transpose fuses into the
    # operand: the kernel reads M_pad*K_pad either way.
    cost = pl.CostEstimate(
        flops=2 * M_pad * K_pad * E_pad,
        transcendentals=0,
        bytes_accessed=(M_pad * K_pad * in_itemsize
                        + K_pad * E_pad * in_itemsize
                        + E_pad * 4
                        + M_pad * E_pad * out_itemsize),
    )

    out = pl.pallas_call(
        patch_embed_kernel,
        out_shape=jax.ShapeDtypeStruct((M_pad, E_pad), out_dtype),
        grid_spec=pltpu.PrefetchScalarGridSpec(
            num_scalar_prefetch=0,
            grid=(num_steps,),
            in_specs=[
                pl.BlockSpec((tm_eff, K_pad), lambda i: (i, 0)),
                pl.BlockSpec((K_pad, E_pad), lambda i: (0, 0)),
                pl.BlockSpec((1, E_pad), lambda i: (0, 0)),
            ],
            out_specs=pl.BlockSpec((tm_eff, E_pad), lambda i: (i, 0)),
        ),
        compiler_params=pltpu.CompilerParams(
            dimension_semantics=("parallel",),
            allow_input_fusion=[True, True, True],
        ),
        cost_estimate=cost,
    )(patches, w_mat, b_mat)

    return out[:M, :E].reshape(B, N, E)


if __name__ == "__main__":
    # Small shapes consistent with the module: img 16x16, 4 channels,
    # patch 4x4 -> 16 patches/image, patch dim 4*4*4 = 64, embed_dim = 32.
    B, C, H, W = 2, 4, 16, 16
    patch_size = 4
    embed_dim = 32

    key = jax.random.PRNGKey(0)
    kx, kw, kb = jax.random.split(key, 3)
    x = jax.random.normal(kx, (B, C, H, W), dtype=jnp.float32)
    weight = jax.random.normal(
        kw, (embed_dim, C, patch_size, patch_size), dtype=jnp.float32) * 0.02
    bias = jax.random.normal(kb, (embed_dim,), dtype=jnp.float32) * 0.02

    fwd_bf16 = jax.jit(lambda a, w, b: patch_embed(a, w, b, patch_size))
    fwd_f32 = jax.jit(lambda a, w, b: patch_embed(
        a, w, b, patch_size, compute_dtype=jnp.float32))

    out_bf16 = jax.block_until_ready(fwd_bf16(x, weight, bias))
    out_f32 = jax.block_until_ready(fwd_f32(x, weight, bias))

    # Reference: the actual strided conv, flatten(2).transpose(1, 2).
    ref = jax.lax.conv_general_dilated(
        x, weight,
        window_strides=(patch_size, patch_size),
        padding="VALID",
        dimension_numbers=("NCHW", "OIHW", "NCHW"),
    ) + bias.reshape(1, embed_dim, 1, 1)
    ref = ref.reshape(B, embed_dim, -1).transpose(0, 2, 1)

    n_patches = (H // patch_size) * (W // patch_size)
    assert out_bf16.shape == (B, n_patches, embed_dim)
    assert out_f32.shape == (B, n_patches, embed_dim)
    assert out_f32.dtype == jnp.float32
    assert out_bf16.dtype == jnp.bfloat16
    assert jnp.allclose(out_f32, ref, atol=1e-4, rtol=1e-4)
    assert jnp.allclose(out_bf16.astype(jnp.float32), ref, atol=3e-2, rtol=3e-2)
    print("KERNEL_OK")
</pallas_src>

<mosaic_0001>
module attributes {stable_mosaic.version = 11 : i64} {
  func.func @patch_embed_kernel(%arg0: i32, %arg1: memref<16x128xbf16, #tpu.memory_space<vmem>>, %arg2: memref<128x128xbf16, #tpu.memory_space<vmem>>, %arg3: memref<1x128xf32, #tpu.memory_space<vmem>>, %arg4: memref<16x128xbf16, #tpu.memory_space<vmem>>) attributes {dimension_semantics = [#tpu.dimension_semantics<parallel>], iteration_bounds = array<i64: 2>, scalar_prefetch = 0 : i64, scratch_operands = 0 : i64, tpu.core_type = #tpu.core_type<tc>, window_params = [{transform_indices = @transform_0, window_bounds = array<i64: 16, 128>}, {pipeline_mode = #tpu.pipeline_mode<synchronous>, transform_indices = @transform_1, window_bounds = array<i64: 128, 128>}, {pipeline_mode = #tpu.pipeline_mode<synchronous>, transform_indices = @transform_2, window_bounds = array<i64: 1, 128>}, {transform_indices = @transform_3, window_bounds = array<i64: 16, 128>}]} {
    %c0 = arith.constant 0 : index
    %c0_0 = arith.constant 0 : index
    %0 = vector.load %arg1[%c0, %c0_0] : memref<16x128xbf16, #tpu.memory_space<vmem>>, vector<16x128xbf16>
    %c0_1 = arith.constant 0 : index
    %c0_2 = arith.constant 0 : index
    %1 = vector.load %arg2[%c0_1, %c0_2] : memref<128x128xbf16, #tpu.memory_space<vmem>>, vector<128x128xbf16>
    %cst = arith.constant dense<0.000000e+00> : vector<16x128xf32>
    %2 = tpu.matmul %0, %1, %cst {dimension_numbers = #tpu.dot_dimension_numbers<[1], [0], [0], [1], [0, 0, 1, 1], [], []>} : vector<16x128xbf16>, vector<128x128xbf16>, vector<16x128xf32> -> vector<16x128xf32>
    %c0_3 = arith.constant 0 : index
    %c0_4 = arith.constant 0 : index
    %3 = vector.load %arg3[%c0_3, %c0_4] : memref<1x128xf32, #tpu.memory_space<vmem>>, vector<1x128xf32>
    %4 = vector.broadcast %3 : vector<1x128xf32> to vector<16x128xf32>
    %5 = arith.addf %2, %4 : vector<16x128xf32>
    %6 = arith.truncf %5 : vector<16x128xf32> to vector<16x128xbf16>
    %c0_5 = arith.constant 0 : index
    %c0_6 = arith.constant 0 : index
    %7 = vector.load %arg4[%c0_5, %c0_6] : memref<16x128xbf16, #tpu.memory_space<vmem>>, vector<16x128xbf16>
    tpu.vector_store %arg4[%c0_5, %c0_6], %6 {strides = array<i32>} : memref<16x128xbf16, #tpu.memory_space<vmem>>, vector<16x128xbf16>,
    return
  }
  func.func @transform_0(%arg0: i32) -> (i32, i32) {
    %c0_i32 = arith.constant 0 : i32
    %c0_i32_0 = arith.constant 0 : i32
    return %arg0, %c0_i32 : i32, i32
  }
  func.func @transform_1(%arg0: i32) -> (i32, i32) {
    %c0_i32 = arith.constant 0 : i32
    %c0_i32_0 = arith.constant 0 : i32
    %c0_i32_1 = arith.constant 0 : i32
    return %c0_i32, %c0_i32_0 : i32, i32
  }
  func.func @transform_2(%arg0: i32) -> (i32, i32) {
    %c0_i32 = arith.constant 0 : i32
    %c0_i32_0 = arith.constant 0 : i32
    %c0_i32_1 = arith.constant 0 : i32
    return %c0_i32, %c0_i32_0 : i32, i32
  }
  func.func @transform_3(%arg0: i32) -> (i32, i32) {
    %c0_i32 = arith.constant 0 : i32
    %c0_i32_0 = arith.constant 0 : i32
    return %arg0, %c0_i32 : i32, i32
  }
}

</mosaic_0001>

<llo_original>
// kernel: _lambda_.2
$region0: #{_lambda_.2}
  #allocation0 [shape = 'u32[]', space=smem, size = 0x4, offset = 0x4, fixed_abs, tag = 'smem constant byte address 0x4 - core index']
  #allocation1 [shape = 'u32[144,128]{1,0:T(1,128)}', space=vmem, size = 0x12000, scoped, tag = 'internal scratch']
  #allocation2 [shape = 'u32[2048]{0}', space=vmem, size = 0x2000, scoped, tag = 'scoped memory for _lambda_.2']
  #allocation3 [shape = 'u32[2048]{0}', space=vmem, size = 0x2000, scoped, tag = 'scoped memory for _lambda_.2']
  #allocation4 [shape = 'u32[2048]{0}', space=vmem, size = 0x2000, scoped, tag = 'scoped memory for _lambda_.2']
  #allocation5 [shape = 'u32[2048]{0}', space=vmem, size = 0x2000, scoped, tag = 'scoped memory for _lambda_.2']
  #allocation6 [shape = 'u32[2048]{0}', space=vmem, size = 0x2000, scoped, tag = 'scoped memory for _lambda_.2']
  #allocation7 [shape = 'u32[2048]{0}', space=vmem, size = 0x2000, scoped, tag = 'scoped memory for _lambda_.2']
  #allocation8 [shape = 'u32[2048]{0}', space=vmem, size = 0x2000, scoped, tag = 'scoped memory for _lambda_.2']
  #allocation9 [shape = 'u32[2048]{0}', space=vmem, size = 0x2000, scoped, tag = 'scoped memory for _lambda_.2']
  #allocation10 [shape = 'u32[2048]{0}', space=vmem, size = 0x2000, scoped, tag = 'scoped memory for _lambda_.2']
  #allocation11 [shape = 'u32[2048]{0}', space=vmem, size = 0x2000, scoped, tag = 'scoped memory for _lambda_.2']
  #allocation12 [shape = 'u32[2048]{0}', space=vmem, size = 0x2000, scoped, tag = 'scoped memory for _lambda_.2']
  #allocation13 [shape = 'u32[2048]{0}', space=vmem, size = 0x2000, scoped, tag = 'scoped memory for _lambda_.2']
  #allocation14 [shape = 'u32[2048]{0}', space=vmem, size = 0x2000, scoped, tag = 'scoped memory for _lambda_.2']
  #allocation15 [shape = 'u32[2048]{0}', space=vmem, size = 0x2000, scoped, tag = 'scoped memory for _lambda_.2']
  #allocation16 [shape = 'u32[2048]{0}', space=vmem, size = 0x2000, scoped, tag = 'scoped memory for _lambda_.2']
  %s0 = inlined_call_operand.vmem [shape: bf16[64,32], index: 0, kind: input, shape index: {}]
  %s1 = inlined_call_operand.<no memory space> [shape: bf16[], index: 1, kind: input, shape index: {}]
  %s2 = inlined_call_operand.vmem [shape: bf16[32,64], index: 2, kind: input, shape index: {}]
  %s3 = inlined_call_operand.vmem [shape: f32[1,32], index: 3, kind: input, shape index: {}]
  %s4 = inlined_call_operand.<no memory space> [shape: f32[], index: 4, kind: input, shape index: {}]
  %s5 = inlined_call_operand.hbm [shape: bf16[32,128], index: 5, kind: output, shape index: {}]
  %s6 = sld [smem:[#allocation0]]
  $region45: #{_lambda_.2} parent=0
    _
  %s8 = ssub.s32 1, %s6
  %s9 = scalar_select 0, %s8, %s6
  %v10 = vstv %s1
  %v11 = vunpack.i.l.bf16 %v10
  %v13 = vunpack.i.h.bf16 %v10
  %v15 = vstv %s1
  %v16 = vunpack.i.l.bf16 %v15
  %v18 = vunpack.i.h.bf16 %v15
  %v20 = vstv %s4
  $region1: #{_lambda_.2} parent=0
    #allocation17 [shape = 'u8[8192]{0}', space=vmem, size = 0x2000, scoped, tag = 'output window, operand 0']
    #allocation18 [shape = 's32[2]{0}', space=sflag, size = 0x8, scoped, tag = 'scoped memory for _lambda_.2']
    %21 = vsyncpa [#allocation18], 0
    %s22 = scalar_lea.sflag [#allocation18], 1
    %23 = vsyncpa %s22, 0
    loop: start=0, step=1, limit=4
    $region2: #{_lambda_.2} parent=1 // loop_pre_header
      _
    $region3: #{_lambda_.2} parent=1 // loop_header
      %s25 = sphi 0, %s29
      %p26 = scmp.ge.s32.totalorder %s25, 4
      %s35 = sphi 0, %s37
      %s38 = sphi 0, %s35
      %s39 = sphi 0, %s38
      %s55 = sphi 0, %s39
      %s59 = sphi 0, %s59
      %s61 = sphi 0, %s59
      %s62 = sphi 0, %s61
      %s76 = sphi 0, %s62
      %s80 = sphi 0, %s80
      %s82 = sphi 0, %s80
      %s83 = sphi 0, %s82
      %s97 = sphi 0, %s83
      %s103 = sphi 0, %s105
      %s106 = sphi 0, %s103
      %s107 = sphi 0, %s106
      %s123 = sphi 0, %s107
    $region4: #{_lambda_.2} parent=1 // loop_header_branch
      %28 = sbr.rel (%p26) target = $region8
    $region5: #{_lambda_.2} parent=1 // loop_body
      %s30 = ssub.s32 %s25, 1
      %s31 = ssub.s32 %s25, 2
      %s32 = sadd.s32 %s25, 1
      %s33 = ssub.s32 %s25, %s32
      %p34 = scmp.eq.s32.totalorder %s33, 0
      %s36 = sadd.s32 %s35, 1
      %s37 = scalar_select %p34, %s35, %s36
      %p40 = pneg %p34
      %p41 = scmp.eq.s32.totalorder %s25, 1
      %p42 = por %p40, %p41
      %p43 = scmp.ne.s32.totalorder %s35, %s38
      %p44 = scmp.eq.s32.totalorder %s25, 0
      %p45 = por %p43, %p44
      %p46 = scmp.ne.s32.totalorder %s35, %s38
      %p47 = scmp.eq.s32.totalorder %s30, 1
      %p48 = por %p46, %p47
      %p49 = scmp.ne.s32.totalorder %s38, %s39
      %p50 = scmp.eq.s32.totalorder %s30, 0
      %p51 = por %p49, %p50
      %p52 = scmp.ne.s32.totalorder %s38, %s39
      %p53 = scmp.eq.s32.totalorder %s31, 1
      %p54 = por %p52, %p53
      %p56 = scmp.ne.s32.totalorder %s39, %s55
      %p57 = scmp.eq.s32.totalorder %s31, 0
      %p58 = por %p56, %p57
      %s60 = sadd.s32 %s59, 1
      %p63 = scmp.eq.s32.totalorder %s25, 1
      %p64 = scmp.ne.s32.totalorder %s59, %s61
      %p65 = scmp.eq.s32.totalorder %s25, 0
      %p66 = por %p64, %p65
      %p67 = scmp.ne.s32.totalorder %s59, %s61
      %p68 = scmp.eq.s32.totalorder %s30, 1
      %p69 = por %p67, %p68
      %p70 = scmp.ne.s32.totalorder %s61, %s62
      %p71 = scmp.eq.s32.totalorder %s30, 0
      %p72 = por %p70, %p71
      %p73 = scmp.ne.s32.totalorder %s61, %s62
      %p74 = scmp.eq.s32.totalorder %s31, 1
      %p75 = por %p73, %p74
      %p77 = scmp.ne.s32.totalorder %s62, %s76
      %p78 = scmp.eq.s32.totalorder %s31, 0
      %p79 = por %p77, %p78
      %s81 = sadd.s32 %s80, 1
      %p84 = scmp.eq.s32.totalorder %s25, 1
      %p85 = scmp.ne.s32.totalorder %s80, %s82
      %p86 = scmp.eq.s32.totalorder %s25, 0
      %p87 = por %p85, %p86
      %p88 = scmp.ne.s32.totalorder %s80, %s82
      %p89 = scmp.eq.s32.totalorder %s30, 1
      %p90 = por %p88, %p89
      %p91 = scmp.ne.s32.totalorder %s82, %s83
      %p92 = scmp.eq.s32.totalorder %s30, 0
      %p93 = por %p91, %p92
      %p94 = scmp.ne.s32.totalorder %s82, %s83
      %p95 = scmp.eq.s32.totalorder %s31, 1
      %p96 = por %p94, %p95
      %p98 = scmp.ne.s32.totalorder %s83, %s97
      %p99 = scmp.eq.s32.totalorder %s31, 0
      %p100 = por %p98, %p99
      %s101 = ssub.s32 %s25, %s32
      %p102 = scmp.eq.s32.totalorder %s101, 0
      %s104 = sadd.s32 %s103, 1
      %s105 = scalar_select %p102, %s103, %s104
      %p108 = pneg %p102
      %p109 = scmp.eq.s32.totalorder %s25, 1
      %p110 = por %p108, %p109
      %p111 = scmp.ne.s32.totalorder %s103, %s106
      %p112 = scmp.eq.s32.totalorder %s25, 0
      %p113 = por %p111, %p112
      %p114 = scmp.ne.s32.totalorder %s103, %s106
      %p115 = scmp.eq.s32.totalorder %s30, 1
      %p116 = por %p114, %p115
      %p117 = scmp.ne.s32.totalorder %s106, %s107
      %p118 = scmp.eq.s32.totalorder %s30, 0
      %p119 = por %p117, %p118
      %p120 = scmp.ne.s32.totalorder %s106, %s107
      %p121 = scmp.eq.s32.totalorder %s31, 1
      %p122 = por %p120, %p121
      %p124 = scmp.ne.s32.totalorder %s107, %s123
      %p125 = scmp.eq.s32.totalorder %s31, 0
      %p126 = por %p124, %p125
      %p127 = scmp.le.s32.totalorder 1, %s25
      %p128 = scmp.lt.s32.totalorder %s25, 3
      %p129 = pnand %p127, %p128
      %p130 = pneg %p129
      // Predicated region
      $region9: #{_lambda_.2} parent=5 // pred_check
        _
      $region10: #{_lambda_.2} parent=5 // pred_check_branch
        %132 = sbr.rel (%p129) target = $region12
      $region11: #{_lambda_.2} parent=5 // pred_region
        %s133 = ssub.s32 %s25, 1
        // Predicated region
        $region13: #{_lambda_.2} parent=11 // pred_check
          %p134 = pneg %p72
        $region14: #{_lambda_.2} parent=11 // pred_check_branch
          %136 = sbr.rel (%p134) target = $region16
        $region15: #{_lambda_.2} parent=11 // pred_region
          _
        $region16: #{_lambda_.2} parent=11 // pred_fallthru
          _
        // Predicated region
        $region17: #{_lambda_.2} parent=11 // pred_check
          %p137 = pneg %p93
        $region18: #{_lambda_.2} parent=11 // pred_check_branch
          %139 = sbr.rel (%p137) target = $region20
        $region19: #{_lambda_.2} parent=11 // pred_region
          _
        $region20: #{_lambda_.2} parent=11 // pred_fallthru
          _
      $region12: #{_lambda_.2} parent=5 // pred_fallthru
        _
      %p140 = scmp.lt.s32.totalorder %s25, 2
      // Predicated region
      $region21: #{_lambda_.2} parent=5 // pred_check
        %p141 = pneg %p140
      $region22: #{_lambda_.2} parent=5 // pred_check_branch
        %143 = sbr.rel (%p141) target = $region24
      $region23: #{_lambda_.2} parent=5 // pred_region
        // Predicated region
        $region25: #{_lambda_.2} parent=23 // pred_check
          %p144 = pneg %p45
        $region26: #{_lambda_.2} parent=23 // pred_check_branch
          %146 = sbr.rel (%p144) target = $region28
        $region27: #{_lambda_.2} parent=23 // pred_region
          %s147 = smul.u32 2, %s25
          %p148 = scmp.lt.s32.totalorder %s147, 3
          %s149 = scalar_select %p148, %s147, 3
          %s150 = smul.addr %s149, 4
          %s151 = scalar_lea.vmem %s2, %s150
          %s152 = smul.u32 2, %s25
        $region28: #{_lambda_.2} parent=23 // pred_fallthru
          _
      $region24: #{_lambda_.2} parent=5 // pred_fallthru
        _
      %p153 = scmp.le.s32.totalorder 1, %s25
      %p154 = scmp.lt.s32.totalorder %s25, 3
      %p155 = pnand %p153, %p154
      %p156 = pneg %p155
      // Predicated region
      $region29: #{_lambda_.2} parent=5 // pred_check
        _
      $region30: #{_lambda_.2} parent=5 // pred_check_branch
        %158 = sbr.rel (%p155) target = $region32
      $region31: #{_lambda_.2} parent=5 // pred_region
        #allocation19 [shape = 'u8[4096]{0}', space=vmem, size = 0x1000, dematerialized = true, scoped, tag = 'FusionAdapter Buffer %fusion.2 = bf16[32,128]{1,0:T(8,128)(2,1)} fusion(%param_2.3, %param_1.5), kind=kLoop, calls=%fused_computation.3.clone, metadata={op_name="jit(<lambda>)/jit(_pad)/pad" stack_frame_id=14}']
        #allocation20 [shape = 'u8[32768]{0}', space=vmem, size = 0x8000, dematerialized = true, scoped, tag = 'FusionAdapter Buffer %fusion.1 = bf16[128,128]{1,0:T(8,128)(2,1)} fusion(%param_0.6, %param_1.5), kind=kLoop, calls=%fused_computation.2.clone, metadata={op_name="jit(<lambda>)/jit(_pad)/pad" stack_frame_id=15}']
        #allocation21 [shape = 'u8[512]{0}', space=vmem, size = 0x400, dematerialized = true, scoped, tag = 'FusionAdapter Buffer %fusion.3 = f32[1,128]{1,0:T(1,128)} fusion(%param_3.2, %param_4), kind=kLoop, calls=%fused_computation.4.clone, metadata={op_name="jit(<lambda>)/jit(_pad)/pad" stack_frame_id=16}']
        %s159 = ssub.s32 %s25, 1
        %s160 = smul.u32 2, %s30
        %p161 = scmp.lt.s32.totalorder %s160, 3
        %s162 = scalar_select %p161, %s160, 3
        %s163 = smul.addr %s162, 4
        %s164 = scalar_lea.vmem %s2, %s163
        %p165 = pneg %p51
        %p166 = pneg %p48
        %p167 = pneg %p72
        %p168 = pneg %p69
        %p169 = pneg %p93
        %p170 = pneg %p90
        %p171 = pneg %p119
        %p172 = pneg %p116
        %s173 = sand.u32 %s106, 1
        %s174 = scalar_lea.sflag [#allocation18], %s173
        %s175 = sand.u32 %s106, 1
        %s176 = smul.addr %s175, 8
        %s177 = scalar_lea.vmem [#allocation17], %s176
        %s178 = smul.u32 2, %s30
        %p179 = scmp.lt.s32.totalorder %s178, 3
        %s180 = scalar_select %p179, %s178, 3
        %s181 = smul.addr %s180, 4
        %s182 = scalar_lea.vmem %s2, %s181
        %s183 = smul.u32 2, %s30
        %s184 = smul.u32 2, %s30
        %s186 = sor.u32 255, 127
        %s187 = sand.u32 %s186, 85
        %s188 = sshrl.u32 %s187, 1
        %s189 = sor.u32 %s187, %s188
        %s190 = sand.u32 51, %s189
        %s191 = sshrl.u32 %s190, 2
        %s192 = sor.u32 %s190, %s191
        %s193 = sand.u32 15, %s192
        %v194 = vld [vmem:[%s182] sm:%s193]
        %v195 = vunpack.c.l.bf16 %v194
        %v196 = vunpack.c.h.bf16 %v194
        %v197 = vlaneseq
        %v198 = vand.u32 %v197, 127
        %vm200 = vcmp.lt.s32.totalorder %v198, 64
        %v201 = vsel %vm200, %v195, %v11
        %v202 = vpack.c.bf16 0.0, %v201
        %204 = vst [vmem:[#allocation19] sm:$0xf] %v202
        %s205 = scalar_lea.vmem %s182, 4
        %s207 = sor.u32 255, 127
        %s208 = sand.u32 %s207, 85
        %s209 = sshrl.u32 %s208, 1
        %s210 = sor.u32 %s208, %s209
        %s211 = sand.u32 51, %s210
        %s212 = sshrl.u32 %s211, 2
        %s213 = sor.u32 %s211, %s212
        %s214 = sand.u32 15, %s213
        %v215 = vld [vmem:[%s205] sm:%s214]
        %v216 = vunpack.c.l.bf16 %v215
        %v217 = vunpack.c.h.bf16 %v215
        %v218 = vlaneseq
        %v219 = vand.u32 %v218, 127
        %vm221 = vcmp.lt.s32.totalorder %v219, 64
        %v222 = vsel %vm221, %v216, %v11
        %s223 = scalar_lea.vmem [#allocation19], 4
        %v224 = vpack.c.bf16 0.0, %v222
        %226 = vst [vmem:[%s223] sm:$0xf] %v224
        %s228 = sor.u32 255, 127
        %s229 = sand.u32 %s228, 85
        %s230 = sshrl.u32 %s229, 1
        %s231 = sor.u32 %s229, %s230
        %s232 = sand.u32 51, %s231
        %s233 = sshrl.u32 %s232, 2
        %s234 = sor.u32 %s232, %s233
        %s235 = sand.u32 15, %s234
        %v236 = vld [vmem:[%s0] sm:%s235]
        %v237 = vunpack.c.l.bf16 %v236
        %v238 = vunpack.c.h.bf16 %v236
        %v239 = vlaneseq
        %v240 = vand.u32 %v239, 127
        %vm242 = vcmp.lt.s32.totalorder %v240, 32
        %v243 = vsel %vm242, %v237, %v16
        %v244 = vpack.c.bf16 0.0, %v243
        %246 = vst [vmem:[#allocation20] sm:$0xf] %v244
        %s247 = scalar_lea.vmem %s0, 4
        %s249 = sor.u32 255, 127
        %s250 = sand.u32 %s249, 85
        %s251 = sshrl.u32 %s250, 1
        %s252 = sor.u32 %s250, %s251
        %s253 = sand.u32 51, %s252
        %s254 = sshrl.u32 %s253, 2
        %s255 = sor.u32 %s253, %s254
        %s256 = sand.u32 15, %s255
        %v257 = vld [vmem:[%s247] sm:%s256]
        %v258 = vunpack.c.l.bf16 %v257
        %v259 = vunpack.c.h.bf16 %v257
        %v260 = vlaneseq
        %v261 = vand.u32 %v260, 127
        %vm263 = vcmp.lt.s32.totalorder %v261, 32
        %v264 = vsel %vm263, %v258, %v16
        %s265 = scalar_lea.vmem [#allocation20], 4
        %v266 = vpack.c.bf16 0.0, %v264
        %268 = vst [vmem:[%s265] sm:$0xf] %v266
        %s269 = scalar_lea.vmem %s0, 8
        %s271 = sor.u32 255, 127
        %s272 = sand.u32 %s271, 85
        %s273 = sshrl.u32 %s272, 1
        %s274 = sor.u32 %s272, %s273
        %s275 = sand.u32 51, %s274
        %s276 = sshrl.u32 %s275, 2
        %s277 = sor.u32 %s275, %s276
        %s278 = sand.u32 15, %s277
        %v279 = vld [vmem:[%s269] sm:%s278]
        %v280 = vunpack.c.l.bf16 %v279
        %v281 = vunpack.c.h.bf16 %v279
        %v282 = vlaneseq
        %v283 = vand.u32 %v282, 127
        %vm285 = vcmp.lt.s32.totalorder %v283, 32
        %v286 = vsel %vm285, %v280, %v16
        %s287 = scalar_lea.vmem [#allocation20], 8
        %v288 = vpack.c.bf16 0.0, %v286
        %290 = vst [vmem:[%s287] sm:$0xf] %v288
        %s291 = scalar_lea.vmem %s0, 12
        %s293 = sor.u32 255, 127
        %s294 = sand.u32 %s293, 85
        %s295 = sshrl.u32 %s294, 1
        %s296 = sor.u32 %s294, %s295
        %s297 = sand.u32 51, %s296
        %s298 = sshrl.u32 %s297, 2
        %s299 = sor.u32 %s297, %s298
        %s300 = sand.u32 15, %s299
        %v301 = vld [vmem:[%s291] sm:%s300]
        %v302 = vunpack.c.l.bf16 %v301
        %v303 = vunpack.c.h.bf16 %v301
        %v304 = vlaneseq
        %v305 = vand.u32 %v304, 127
        %vm307 = vcmp.lt.s32.totalorder %v305, 32
        %v308 = vsel %vm307, %v302, %v16
        %s309 = scalar_lea.vmem [#allocation20], 12
        %v310 = vpack.c.bf16 0.0, %v308
        %312 = vst [vmem:[%s309] sm:$0xf] %v310
        %s313 = scalar_lea.vmem %s0, 16
        %s315 = sor.u32 255, 127
        %s316 = sand.u32 %s315, 85
        %s317 = sshrl.u32 %s316, 1
        %s318 = sor.u32 %s316, %s317
        %s319 = sand.u32 51, %s318
        %s320 = sshrl.u32 %s319, 2
        %s321 = sor.u32 %s319, %s320
        %s322 = sand.u32 15, %s321
        %v323 = vld [vmem:[%s313] sm:%s322]
        %v324 = vunpack.c.l.bf16 %v323
        %v325 = vunpack.c.h.bf16 %v323
        %v326 = vlaneseq
        %v327 = vand.u32 %v326, 127
        %vm329 = vcmp.lt.s32.totalorder %v327, 32
        %v330 = vsel %vm329, %v324, %v16
        %s331 = scalar_lea.vmem [#allocation20], 16
        %v332 = vpack.c.bf16 0.0, %v330
        %334 = vst [vmem:[%s331] sm:$0xf] %v332
        %s335 = scalar_lea.vmem %s0, 20
        %s337 = sor.u32 255, 127
        %s338 = sand.u32 %s337, 85
        %s339 = sshrl.u32 %s338, 1
        %s340 = sor.u32 %s338, %s339
        %s341 = sand.u32 51, %s340
        %s342 = sshrl.u32 %s341, 2
        %s343 = sor.u32 %s341, %s342
        %s344 = sand.u32 15, %s343
        %v345 = vld [vmem:[%s335] sm:%s344]
        %v346 = vunpack.c.l.bf16 %v345
        %v347 = vunpack.c.h.bf16 %v345
        %v348 = vlaneseq
        %v349 = vand.u32 %v348, 127
        %vm351 = vcmp.lt.s32.totalorder %v349, 32
        %v352 = vsel %vm351, %v346, %v16
        %s353 = scalar_lea.vmem [#allocation20], 20
        %v354 = vpack.c.bf16 0.0, %v352
        %356 = vst [vmem:[%s353] sm:$0xf] %v354
        %s357 = scalar_lea.vmem %s0, 24
        %s359 = sor.u32 255, 127
        %s360 = sand.u32 %s359, 85
        %s361 = sshrl.u32 %s360, 1
        %s362 = sor.u32 %s360, %s361
        %s363 = sand.u32 51, %s362
        %s364 = sshrl.u32 %s363, 2
        %s365 = sor.u32 %s363, %s364
        %s366 = sand.u32 15, %s365
        %v367 = vld [vmem:[%s357] sm:%s366]
        %v368 = vunpack.c.l.bf16 %v367
        %v369 = vunpack.c.h.bf16 %v367
        %v370 = vlaneseq
        %v371 = vand.u32 %v370, 127
        %vm373 = vcmp.lt.s32.totalorder %v371, 32
        %v374 = vsel %vm373, %v368, %v16
        %s375 = scalar_lea.vmem [#allocation20], 24
        %v376 = vpack.c.bf16 0.0, %v374
        %378 = vst [vmem:[%s375] sm:$0xf] %v376
        %s379 = scalar_lea.vmem %s0, 28
        %s381 = sor.u32 255, 127
        %s382 = sand.u32 %s381, 85
        %s383 = sshrl.u32 %s382, 1
        %s384 = sor.u32 %s382, %s383
        %s385 = sand.u32 51, %s384
        %s386 = sshrl.u32 %s385, 2
        %s387 = sor.u32 %s385, %s386
        %s388 = sand.u32 15, %s387
        %v389 = vld [vmem:[%s379] sm:%s388]
        %v390 = vunpack.c.l.bf16 %v389
        %v391 = vunpack.c.h.bf16 %v389
        %v392 = vlaneseq
        %v393 = vand.u32 %v392, 127
        %vm395 = vcmp.lt.s32.totalorder %v393, 32
        %v396 = vsel %vm395, %v390, %v16
        %s397 = scalar_lea.vmem [#allocation20], 28
        %v398 = vpack.c.bf16 0.0, %v396
        %400 = vst [vmem:[%s397] sm:$0xf] %v398
        %s401 = scalar_lea.vmem [#allocation20], 32
        %v402 = vpack.c.bf16 0.0, %v16
        %404 = vst [vmem:[%s401] sm:$0xf] %v402
        %s405 = scalar_lea.vmem [#allocation20], 36
        %v406 = vpack.c.bf16 0.0, %v16
        %408 = vst [vmem:[%s405] sm:$0xf] %v406
        %s409 = scalar_lea.vmem [#allocation20], 40
        %v410 = vpack.c.bf16 0.0, %v16
        %412 = vst [vmem:[%s409] sm:$0xf] %v410
        %s413 = scalar_lea.vmem [#allocation20], 44
        %v414 = vpack.c.bf16 0.0, %v16
        %416 = vst [vmem:[%s413] sm:$0xf] %v414
        %s417 = scalar_lea.vmem [#allocation20], 48
        %v418 = vpack.c.bf16 0.0, %v16
        %420 = vst [vmem:[%s417] sm:$0xf] %v418
        %s421 = scalar_lea.vmem [#allocation20], 52
        %v422 = vpack.c.bf16 0.0, %v16
        %424 = vst [vmem:[%s421] sm:$0xf] %v422
        %s425 = scalar_lea.vmem [#allocation20], 56
        %v426 = vpack.c.bf16 0.0, %v16
        %428 = vst [vmem:[%s425] sm:$0xf] %v426
        %s429 = scalar_lea.vmem [#allocation20], 60
        %v430 = vpack.c.bf16 0.0, %v16
        %432 = vst [vmem:[%s429] sm:$0xf] %v430
        %v433 = vld [vmem:[%s3] sm:$0x1]
        %v434 = vlaneseq
        %v435 = vshrl.u32 %v434, 7
        %vm437 = vcmp.lt.s32.totalorder %v435, 1
        %v438 = vsel %vm437, %v433, %v20
        %v439 = vlaneseq
        %v440 = vand.u32 %v439, 127
        %vm442 = vcmp.lt.s32.totalorder %v440, 32
        %v443 = vsel %vm442, %v438, %v20
        %445 = vst [vmem:[#allocation21] sm:$0x1] %v443
        %v447 = vld [vmem:[#allocation19] sm:$0xf]
        %v448 = vld [vmem:[#allocation19 + $0x4] sm:$0xf]
        %v449 = vld [vmem:[#allocation20] sm:$0xf]
        %v450 = vld [vmem:[#allocation20 + $0x4] sm:$0xf]
        %v451 = vld [vmem:[#allocation20 + $0x8] sm:$0xf]
        %v452 = vld [vmem:[#allocation20 + $0xc] sm:$0xf]
        %v453 = vld [vmem:[#allocation20 + $0x10] sm:$0xf]
        %v454 = vld [vmem:[#allocation20 + $0x14] sm:$0xf]
        %v455 = vld [vmem:[#allocation20 + $0x18] sm:$0xf]
        %v456 = vld [vmem:[#allocation20 + $0x1c] sm:$0xf]
        %v457 = vld [vmem:[#allocation20 + $0x20] sm:$0xf]
        %v458 = vld [vmem:[#allocation20 + $0x24] sm:$0xf]
        %v459 = vld [vmem:[#allocation20 + $0x28] sm:$0xf]
        %v460 = vld [vmem:[#allocation20 + $0x2c] sm:$0xf]
        %v461 = vld [vmem:[#allocation20 + $0x30] sm:$0xf]
        %v462 = vld [vmem:[#allocation20 + $0x34] sm:$0xf]
        %v463 = vld [vmem:[#allocation20 + $0x38] sm:$0xf]
        %v464 = vld [vmem:[#allocation20 + $0x3c] sm:$0xf]
        %v465 = vld [vmem:[#allocation21] sm:$0x1]
        %v467 = vlaneseq
        %v468 = vshrl.u32 %v467, 7
        %v469 = vsub.s32 0, %v468
        %v470 = vrot.slane %v465, %v469
        %v474 = vunpack.c.l.b16 %v447
        %v475 = vunpack.c.l.b16 %v448
        %v476 = vpack.c.b16 %v475, %v474
        %v494 = vunpack.c.l.b16 %v449
        %v495 = vunpack.c.l.b16 %v450
        %v496 = vunpack.c.l.b16 %v451
        %v497 = vunpack.c.l.b16 %v452
        %v498 = vunpack.c.l.b16 %v453
        %v499 = vunpack.c.l.b16 %v454
        %v500 = vunpack.c.l.b16 %v455
        %v501 = vunpack.c.l.b16 %v456
        %v502 = vunpack.c.l.b16 %v457
        %v503 = vunpack.c.l.b16 %v458
        %v504 = vunpack.c.l.b16 %v459
        %v505 = vunpack.c.l.b16 %v460
        %v506 = vunpack.c.l.b16 %v461
        %v507 = vunpack.c.l.b16 %v462
        %v508 = vunpack.c.l.b16 %v463
        %v509 = vunpack.c.l.b16 %v464
        %v510 = vpack.c.b16 %v495, %v494
        %v511 = vpack.c.b16 %v497, %v496
        %v512 = vpack.c.b16 %v499, %v498
        %v513 = vpack.c.b16 %v501, %v500
        %v514 = vpack.c.b16 %v503, %v502
        %v515 = vpack.c.b16 %v505, %v504
        %v516 = vpack.c.b16 %v507, %v506
        %v517 = vpack.c.b16 %v509, %v508
        %526 = vmatprep.subr.bf16.mxu0 0
        %527 = vmatpush1.bf16.msra.mxu0 %v510
        %528 = vmatprep.subr.bf16.mxu0 0
        %529 = vmatpush1.bf16.msra.mxu0 %v511
        %530 = vmatprep.subr.bf16.mxu0 0
        %531 = vmatpush1.bf16.msra.mxu0 %v512
        %532 = vmatprep.subr.bf16.mxu0 0
        %533 = vmatpush1.bf16.msra.mxu0 %v513
        %534 = vmatprep.subr.bf16.mxu0 0
        %535 = vmatpush1.bf16.msra.mxu0 %v514
        %536 = vmatprep.subr.bf16.mxu0 0
        %537 = vmatpush1.bf16.msra.mxu0 %v515
        %538 = vmatprep.subr.bf16.mxu0 0
        %539 = vmatpush1.bf16.msra.mxu0 %v516
        %540 = vmatprep.subr.bf16.mxu0 0
        %541 = vmatpush1.bf16.msra.mxu0 %v517
        %542 = vmatprep.subr.bf16.mxu0 0
        %543 = vmatpush1.bf16.msra.mxu0 0
        %544 = vmatprep.subr.bf16.mxu0 0
        %545 = vmatpush1.bf16.msra.mxu0 0
        %546 = vmatprep.subr.bf16.mxu0 0
        %547 = vmatpush1.bf16.msra.mxu0 0
        %548 = vmatprep.subr.bf16.mxu0 0
        %549 = vmatpush1.bf16.msra.mxu0 0
        %550 = vmatprep.subr.bf16.mxu0 0
        %551 = vmatpush1.bf16.msra.mxu0 0
        %552 = vmatprep.subr.bf16.mxu0 0
        %553 = vmatpush1.bf16.msra.mxu0 0
        %554 = vmatprep.subr.bf16.mxu0 0
        %555 = vmatpush1.bf16.msra.mxu0 0
        %556 = vmatprep.subr.bf16.mxu0 0
        %557 = vmatpush1.bf16.msra.mxu0 0
        %558 = vmatprep.mubr.bf16.mxu0 0
        %559 = vmatmul.mubr.bf16.gmra.mrb[0].mxu0 %v476
        %v560 = vpop.f32.mrb[0].mxu0
        %v561 = vadd.f32 %v470, %v560
        %v562 = vpop.f32.mrb[0].mxu0
        %v563 = vpop.f32.mrb[0].mxu0
        %v564 = vadd.f32 %v470, %v563
        %v565 = vpop.f32.mrb[0].mxu0
        %566 = vdwg.mxu0
        %v567 = vpack.c.bf16 %v564, %v561
        %v569 = vunpack.c.l.b16 %v567
        %v570 = vunpack.c.h.b16 %v567
        %v571 = vpack.c.b16 %v569, %v569
        %v572 = vpack.c.b16 %v570, %v570
        %575 = vst [vmem:[%s177] sm:$0xf] %v571
        %576 = vst [vmem:[%s177 + $0x4] sm:$0xf] %v572
        %s577 = sand.u32 %s106, 1
        %s578 = scalar_lea.sflag [#allocation18], %s577
        %s579 = sand.u32 %s106, 1
        %s580 = smul.addr %s579, 8
        %s581 = scalar_lea.vmem [#allocation17], %s580
        // Predicated region
        $region33: #{_lambda_.2} parent=31 // pred_check
          %p582 = pneg %p116
        $region34: #{_lambda_.2} parent=31 // pred_check_branch
          %584 = sbr.rel (%p582) target = $region36
        $region35: #{_lambda_.2} parent=31 // pred_region
          %s585 = smul.u32 2, %s30
          %s587 = ssub.s32 128, 128
          %588 = vsyncadd %s578, %s587
          %s589 = smul.addr %s585, 64
          %s590 = scalar_lea.hbm %s5, %s589
          %s591 = sshll.u32 %s581, 4
          %s592 = int_to_ptr.vmem [resolvable:$true] %s591
          %597 = dma.vmem_to_hbm [thread:$0]  %s592, 128, %s590, %s578, 64, 64, 4
        $region36: #{_lambda_.2} parent=31 // pred_fallthru
          _
      $region32: #{_lambda_.2} parent=5 // pred_fallthru
        _
      %p598 = scmp.le.s32.totalorder 2, %s25
      // Predicated region
      $region37: #{_lambda_.2} parent=5 // pred_check
        %p599 = pneg %p598
      $region38: #{_lambda_.2} parent=5 // pred_check_branch
        %601 = sbr.rel (%p599) target = $region40
      $region39: #{_lambda_.2} parent=5 // pred_region
        %s602 = ssub.s32 %s25, 2
        // Predicated region
        $region41: #{_lambda_.2} parent=39 // pred_check
          %p603 = pneg %p122
        $region42: #{_lambda_.2} parent=39 // pred_check_branch
          %605 = sbr.rel (%p603) target = $region44
        $region43: #{_lambda_.2} parent=39 // pred_region
          %s606 = sand.u32 %s107, 1
          %s607 = scalar_lea.sflag [#allocation18], %s606
          %s608 = sand.u32 %s107, 1
          %s609 = smul.addr %s608, 8
          %s610 = scalar_lea.vmem [#allocation17], %s609
          %611 = dma.done %s607, 128
        $region44: #{_lambda_.2} parent=39 // pred_fallthru
          _
      $region40: #{_lambda_.2} parent=5 // pred_fallthru
        _
    $region6: #{_lambda_.2} parent=1 // loop_footer
      %s29 = sadd.s32 1, %s25
    $region7: #{_lambda_.2} parent=1 // loop_footer_branch
      %24 = sbr.rel target = $region3
    $region8: #{_lambda_.2} parent=1 // loop_exit
      _
    %612 = vsyncpa [#allocation18], 1
    %s613 = scalar_lea.sflag [#allocation18], 1
    %614 = vsyncpa %s613, 1

</llo_original>
